<compile_context>
chip_gen: v7x
topology: tpu7x:2x2x1
jax: 0.10.0
libtpu: 0.0.40
codegen_flags: <defaults>
</compile_context>

<pallas_src>
import functools

import jax
import jax.numpy as jnp
import numpy as np
from jax import lax
from jax.experimental import pallas as pl
from jax.experimental.pallas import tpu as pltpu


# ---------------------------------------------------------------------------
# Tiled sum-reduction kernels (lane-dense layout, pipelined, f32 accumulate).
# ---------------------------------------------------------------------------

_LANE = 512  # lane width of a tile (multiple of 128)


def _round_up(x, m):
    return -(-x // m) * m


@functools.lru_cache(maxsize=None)
def _chip_config():
    """Per-generation tiling: (megacore parts, target tile bytes per input)."""
    try:
        kind = jax.devices()[0].device_kind.lower()
    except Exception:  # pragma: no cover - defensive, e.g. no devices yet
        kind = ""
    if "v7" in kind:
        # 2 TensorCores/chip, ~3.2 TB/s HBM per TC: big tiles + parallel split.
        return {"parts": 2, "tile_bytes": 4 << 20}
    if "v6" in kind:
        # single TC; ~1.4 TB/s HBM: 4 MiB tiles hide the ~0.35us/step overhead.
        return {"parts": 1, "tile_bytes": 4 << 20}
    # v5e (and unknown chips): ~820 GB/s HBM, small scoped-VMEM default.
    return {"parts": 1, "tile_bytes": 1 << 20}


def _pair_reduce_kernel(a_ref, b_ref, part_ref, acc_ref, *, squared, rows, steps):
    """Accumulate sum(|a-b|) or sum((a-b)^2) over a (parts, steps) grid."""
    p = pl.program_id(0)
    s = pl.program_id(1)

    @pl.when(s == 0)
    def _init():
        acc_ref[...] = jnp.zeros_like(acc_ref)

    r, c = a_ref.shape
    # Nominal (un-clamped) first row of this tile.  Rows past the end of the
    # tensor (ragged tail / phantom tiles on the parallel axis) are masked; the
    # index_map clamps the DMA itself in-bounds so OOB garbage never escapes.
    start = (p * steps + s) * r
    valid = (start + lax.broadcasted_iota(jnp.int32, (r, 1), 0)) < rows

    d = a_ref[...].astype(jnp.float32) - b_ref[...].astype(jnp.float32)
    v = d * d if squared else jnp.abs(d)
    v = jnp.where(valid, v, 0.0)
    # Lane-wise partial sums: fold rows in groups of 8 into the (8, LANE) VPU
    # accumulator; the single cross-lane reduction happens once in the wrapper.
    acc_ref[...] += jnp.sum(v.reshape(r // 8, 8, c), axis=0)

    @pl.when(s == pl.num_programs(1) - 1)
    def _fin():
        part_ref[0, :, :] = acc_ref[...]


def _sq_reduce_kernel(a_ref, part_ref, acc_ref, *, rows, steps):
    """Accumulate sum(a^2) over a (parts, steps) grid (R1 gradient penalty)."""
    p = pl.program_id(0)
    s = pl.program_id(1)

    @pl.when(s == 0)
    def _init():
        acc_ref[...] = jnp.zeros_like(acc_ref)

    r, c = a_ref.shape
    start = (p * steps + s) * r
    valid = (start + lax.broadcasted_iota(jnp.int32, (r, 1), 0)) < rows

    a = a_ref[...].astype(jnp.float32)
    v = jnp.where(valid, a * a, 0.0)
    acc_ref[...] += jnp.sum(v.reshape(r // 8, 8, c), axis=0)

    @pl.when(s == pl.num_programs(1) - 1)
    def _fin():
        part_ref[0, :, :] = acc_ref[...]


def _pallas_reduce_sum(kernel_body, arrays, tail_sum, flops_per_elem):
    """Sum of an elementwise function of `arrays` over all elements.

    Streams a lane-dense (rows, 512) view of the flattened tensors through a
    tiled Pallas grid reduction.  No host-side padding copies: the view is a
    free reshape and ragged tails are masked in-kernel / reduced with jnp.
    """
    n = int(arrays[0].size)
    assert all(a.shape == arrays[0].shape for a in arrays)
    itemsize = arrays[0].dtype.itemsize
    rows = n // _LANE
    rem = n - rows * _LANE

    flats = [a.reshape(-1) for a in arrays]  # contiguous reshape: no HBM copy
    total = jnp.zeros((), jnp.float32)
    if rem:
        # Ragged (<512-element) remainder: tiny jnp reduction instead of a pad.
        total = total + tail_sum(*[f[rows * _LANE:] for f in flats])
    if rows == 0:
        return total
    if rows < 8:
        # Smaller than one sublane group: a kernel launch costs more than jnp.
        return total + tail_sum(*[f[: rows * _LANE] for f in flats])

    if rem == 0:
        mains = [f.reshape(rows, _LANE) for f in flats]  # free bitcast reshape
    else:
        # Rare (size not a multiple of 512): one slice copy of the main body.
        mains = [f[: rows * _LANE].reshape(rows, _LANE) for f in flats]

    cfg = _chip_config()
    sub = max(8, 32 // itemsize)  # sublane packing: f32->8, bf16->16, int8->32
    target_rows = max(sub, (cfg["tile_bytes"] // (_LANE * itemsize)) // sub * sub)
    rows_per_tile = min(target_rows, _round_up(rows, sub))
    tiles = pl.cdiv(rows, rows_per_tile)
    parts = min(cfg["parts"], tiles)
    steps = pl.cdiv(tiles, parts)
    tile_bytes = rows_per_tile * _LANE * itemsize

    # Clamp the tile index so edge / phantom tiles still DMA in-bounds data;
    # the kernel masks them using the *nominal* index.
    in_spec = pl.BlockSpec(
        (rows_per_tile, _LANE),
        lambda p, s: (jnp.minimum(p * steps + s, tiles - 1), 0))
    # 2 pipeline buffers per streamed input + elementwise temporaries + headroom.
    vmem_limit = int((2 * len(arrays) + 6) * tile_bytes) + (8 << 20)

    partials = pl.pallas_call(
        functools.partial(kernel_body, rows=rows, steps=steps),
        grid=(parts, steps),
        in_specs=[in_spec] * len(arrays),
        out_specs=pl.BlockSpec((1, 8, _LANE), lambda p, s: (p, 0, 0)),
        out_shape=jax.ShapeDtypeStruct((parts, 8, _LANE), jnp.float32),
        scratch_shapes=[pltpu.VMEM((8, _LANE), jnp.float32)],
        compiler_params=pltpu.CompilerParams(
            dimension_semantics=("parallel", "arbitrary"),
            vmem_limit_bytes=vmem_limit),
        cost_estimate=pl.CostEstimate(
            flops=int(flops_per_elem) * rows * _LANE,
            transcendentals=0,
            bytes_accessed=int(len(arrays) * rows * _LANE * itemsize
                               + parts * 8 * _LANE * 4)),
    )(*mains)
    return total + jnp.sum(partials)


def pixel_loss_mean(pred, target, *, squared):
    """Pallas equivalent of nn.L1Loss / nn.MSELoss with reduction='mean'."""
    n = pred.size
    if squared:
        tail = lambda a, b: jnp.sum(
            (a.astype(jnp.float32) - b.astype(jnp.float32)) ** 2)
    else:
        tail = lambda a, b: jnp.sum(
            jnp.abs(a.astype(jnp.float32) - b.astype(jnp.float32)))
    total = _pallas_reduce_sum(
        functools.partial(_pair_reduce_kernel, squared=squared),
        [pred, target], tail, flops_per_elem=3)
    return total / n


def sum_of_squares(x):
    """Pallas tiled sum(x**2) (used by the R1 gradient penalty)."""
    tail = lambda a: jnp.sum(a.astype(jnp.float32) ** 2)
    return _pallas_reduce_sum(_sq_reduce_kernel, [x], tail, flops_per_elem=2)


# ---------------------------------------------------------------------------
# NLayerDiscriminator (PatchGAN): bf16 / NHWC convs on the MXU, f32 BN + loss.
# ---------------------------------------------------------------------------

def init_nlayer_discriminator(key, input_nc=3, ndf=64, n_layers=3):
    """PatchGAN params (HWIO conv weights), weights_init-style N(0, 0.02)."""
    def conv_w(k, cin, cout):
        return 0.02 * jax.random.normal(k, (4, 4, cin, cout), jnp.float32)

    keys = iter(jax.random.split(key, 2 * (n_layers + 2)))
    layers = [dict(w=conv_w(next(keys), input_nc, ndf),
                   b=jnp.zeros((ndf,), jnp.float32), stride=2, bn=None)]
    nf = 1
    for n in range(1, n_layers):
        nf_prev, nf = nf, min(2 ** n, 8)
        gamma = 1.0 + 0.02 * jax.random.normal(next(keys), (ndf * nf,), jnp.float32)
        layers.append(dict(w=conv_w(next(keys), ndf * nf_prev, ndf * nf),
                           b=None, stride=2,
                           bn=(gamma, jnp.zeros((ndf * nf,), jnp.float32))))
    nf_prev, nf = nf, min(2 ** n_layers, 8)
    gamma = 1.0 + 0.02 * jax.random.normal(next(keys), (ndf * nf,), jnp.float32)
    layers.append(dict(w=conv_w(next(keys), ndf * nf_prev, ndf * nf),
                       b=None, stride=1,
                       bn=(gamma, jnp.zeros((ndf * nf,), jnp.float32))))
    layers.append(dict(w=conv_w(next(keys), ndf * nf, 1),
                       b=jnp.zeros((1,), jnp.float32), stride=1, bn=None))
    return layers


def _batch_norm_nhwc(x, gamma, beta, eps=1e-5):
    # TODO(synk): uses per-batch statistics only (PyTorch train-mode BN); no
    # running mean/var so eval-mode behavior would diverge from BatchNorm2d.
    mean = jnp.mean(x, axis=(0, 1, 2), keepdims=True)
    var = jnp.var(x, axis=(0, 1, 2), keepdims=True)
    xhat = (x - mean) * lax.rsqrt(var + eps)
    return xhat * gamma.reshape(1, 1, 1, -1) + beta.reshape(1, 1, 1, -1)


def apply_discriminator(layers, x_nchw):
    """PatchGAN forward: bf16 NHWC convs (MXU), BN / activations in f32."""
    x = jnp.transpose(x_nchw, (0, 2, 3, 1)).astype(jnp.bfloat16)
    last = len(layers) - 1
    for i, layer in enumerate(layers):
        y = lax.conv_general_dilated(
            x, layer["w"].astype(jnp.bfloat16),
            window_strides=(layer["stride"], layer["stride"]),
            padding=((1, 1), (1, 1)),
            dimension_numbers=("NHWC", "HWIO", "NHWC"),
            preferred_element_type=jnp.float32)
        if layer["b"] is not None:
            y = y + layer["b"].reshape(1, 1, 1, -1)
        if layer["bn"] is not None:
            y = _batch_norm_nhwc(y, *layer["bn"])
        if i < last:
            y = jnp.where(y >= 0, y, 0.2 * y)          # LeakyReLU(0.2)
            x = y.astype(jnp.bfloat16)
        else:
            x = y                                       # final logits stay f32
    return jnp.transpose(x, (0, 3, 1, 2))               # tiny; back to NCHW


# ---------------------------------------------------------------------------
# The loss module (forward pass).
# ---------------------------------------------------------------------------

class AutoencoderLPIPSWithDiscriminator:
    """JAX/Pallas port of AutoencoderLPIPSWithDiscriminator.forward."""

    def __init__(self, key, disc_start=0, rec_img_weight=1.0, rec_lat_weight=1.0,
                 perceptual_weight=1.0, disc_weight=1.0, disc_num_layers=3,
                 disc_in_channels=3, disc_loss="hinge", pixel_loss="l1",
                 r1_gamma=5.0):
        assert disc_loss in ("hinge", "vanilla", "hinge_r1")
        assert pixel_loss in ("l1", "l2")
        self.rec_img_weight = rec_img_weight
        self.rec_lat_weight = rec_lat_weight
        self.perceptual_weight = perceptual_weight
        self.disc_weight = disc_weight
        self.discriminator_iter_start = disc_start
        self.disc_loss = disc_loss
        self.squared_pixel_loss = pixel_loss == "l2"
        self.r1_gamma = r1_gamma
        self.disc_params = init_nlayer_discriminator(
            key, input_nc=disc_in_channels, n_layers=disc_num_layers)
        # TODO(synk): LPIPS perceptual loss needs pretrained VGG16 + linear-head
        # weights that cannot be bundled in-script; perc_img contributes 0 here.

    def __call__(self, inputs, recons, img_inputs, img_recons,
                 optimizer_idx, global_step, split="train"):
        # Works with both concrete ints and traced arrays for global_step.
        disc_active = (jnp.asarray(global_step)
                       >= self.discriminator_iter_start).astype(jnp.float32)

        if optimizer_idx == 0:
            rec_lat = pixel_loss_mean(recons, inputs, squared=self.squared_pixel_loss)
            rec_img = pixel_loss_mean(img_recons, img_inputs,
                                      squared=self.squared_pixel_loss)
            perc_img = jnp.zeros((), jnp.float32)  # TODO(synk): LPIPS placeholder.
            nll_loss = (self.rec_lat_weight * rec_lat
                        + self.rec_img_weight * rec_img
                        + self.perceptual_weight * perc_img)
            logits_fake = apply_discriminator(self.disc_params, img_recons)
            gen_loss = -jnp.mean(logits_fake)   # tiny; XLA fuses into conv epilogue
            loss = nll_loss + self.disc_weight * disc_active * gen_loss
            log = {
                f"{split}/rec_img_loss": rec_img,
                f"{split}/rec_lat_loss": rec_lat,
                f"{split}/perc_img_loss": perc_img,
                f"{split}/nll_loss": nll_loss,
                f"{split}/gen_loss": gen_loss,
            }
            return loss, log

        if optimizer_idx == 1:
            real = lax.stop_gradient(img_inputs)
            fake = lax.stop_gradient(img_recons)
            if self.disc_loss == "hinge_r1":
                # One discriminator pass on real images yields BOTH the logits
                # and the R1 gradient (value_and_grad w/ aux) instead of two.
                def _sum_and_logits(im):
                    lg = apply_discriminator(self.disc_params, im)
                    return jnp.sum(lg), lg

                (_, logits_real), grad_real = jax.value_and_grad(
                    _sum_and_logits, has_aux=True)(real)
                logits_fake = apply_discriminator(self.disc_params, fake)
                hinge = (jnp.mean(jax.nn.relu(1.0 - logits_real))
                         + jnp.mean(jax.nn.relu(1.0 + logits_fake)))
                r1 = 0.5 * self.r1_gamma * sum_of_squares(grad_real) / real.shape[0]
                d_loss = hinge + r1
            else:
                logits_real = apply_discriminator(self.disc_params, real)
                logits_fake = apply_discriminator(self.disc_params, fake)
                if self.disc_loss == "hinge":
                    d_loss = 0.5 * (jnp.mean(jax.nn.relu(1.0 - logits_real))
                                    + jnp.mean(jax.nn.relu(1.0 + logits_fake)))
                else:  # vanilla
                    d_loss = 0.5 * (jnp.mean(jax.nn.softplus(-logits_real))
                                    + jnp.mean(jax.nn.softplus(logits_fake)))
            loss = disc_active * d_loss
            log = {
                f"{split}/disc_loss": d_loss,
                f"{split}/disc_active": disc_active,
                f"{split}/logits_real": jnp.mean(logits_real),
                f"{split}/logits_fake": jnp.mean(logits_fake),
            }
            return loss, log

        raise ValueError(f"unsupported optimizer_idx={optimizer_idx}")


# ---------------------------------------------------------------------------
# Pure-JAX reference (same math, jnp reductions) for validation.
# ---------------------------------------------------------------------------

def _ref_forward(model, inputs, recons, img_inputs, img_recons, optimizer_idx,
                 global_step):
    disc_active = (jnp.asarray(global_step)
                   >= model.discriminator_iter_start).astype(jnp.float32)
    if model.squared_pixel_loss:
        pix = lambda a, b: jnp.mean((a - b) ** 2)
    else:
        pix = lambda a, b: jnp.mean(jnp.abs(a - b))
    if optimizer_idx == 0:
        rec_lat = pix(recons, inputs)
        rec_img = pix(img_recons, img_inputs)
        nll = model.rec_lat_weight * rec_lat + model.rec_img_weight * rec_img
        gen = -jnp.mean(apply_discriminator(model.disc_params, img_recons))
        return nll + model.disc_weight * disc_active * gen
    lr = apply_discriminator(model.disc_params, img_inputs)
    lf = apply_discriminator(model.disc_params, img_recons)
    if model.disc_loss == "hinge":
        d = 0.5 * (jnp.mean(jax.nn.relu(1.0 - lr)) + jnp.mean(jax.nn.relu(1.0 + lf)))
    elif model.disc_loss == "vanilla":
        d = 0.5 * (jnp.mean(jax.nn.softplus(-lr)) + jnp.mean(jax.nn.softplus(lf)))
    else:
        grad_real = jax.grad(
            lambda im: jnp.sum(apply_discriminator(model.disc_params, im)))(img_inputs)
        r1 = 0.5 * model.r1_gamma * jnp.mean(
            jnp.sum(grad_real.reshape(grad_real.shape[0], -1) ** 2, axis=1))
        d = jnp.mean(jax.nn.relu(1.0 - lr)) + jnp.mean(jax.nn.relu(1.0 + lf)) + r1
    return disc_active * d


if __name__ == "__main__":
    key = jax.random.PRNGKey(0)
    k_disc, k1, k2, k3, k4, k5 = jax.random.split(key, 6)

    # Latent ("linear autoencoder" code) tensors and image tensors, small shapes.
    inputs = jax.random.normal(k1, (2, 4, 32, 32), jnp.float32)
    recons = inputs + 0.1 * jax.random.normal(k2, (2, 4, 32, 32), jnp.float32)
    img_inputs = jax.random.normal(k3, (2, 3, 64, 64), jnp.float32)
    img_recons = img_inputs + 0.1 * jax.random.normal(k4, (2, 3, 64, 64), jnp.float32)

    # Standalone checks of the Pallas reductions (incl. ragged-row masking path).
    zq = jax.random.normal(k5, (9, 512), jnp.float32)       # 9 rows -> masked tile
    got_sq = jax.block_until_ready(sum_of_squares(zq))
    np.testing.assert_allclose(np.asarray(got_sq), np.asarray(jnp.sum(zq ** 2)),
                               rtol=1e-5)
    got_l1 = jax.block_until_ready(
        pixel_loss_mean(img_recons, img_inputs, squared=False))
    np.testing.assert_allclose(
        np.asarray(got_l1), np.asarray(jnp.mean(jnp.abs(img_recons - img_inputs))),
        rtol=1e-5)

    model = AutoencoderLPIPSWithDiscriminator(
        k_disc, disc_start=0, disc_loss="hinge", pixel_loss="l1")

    # Generator path (optimizer_idx=0).
    loss0, log0 = model(inputs, recons, img_inputs, img_recons,
                        optimizer_idx=0, global_step=1)
    loss0 = jax.block_until_ready(loss0)
    ref0 = _ref_forward(model, inputs, recons, img_inputs, img_recons, 0, 1)
    assert np.allclose(np.asarray(loss0), np.asarray(ref0), rtol=1e-4, atol=1e-5)
    assert np.allclose(np.asarray(log0["train/rec_lat_loss"]),
                       np.asarray(jnp.mean(jnp.abs(recons - inputs))),
                       rtol=1e-5, atol=1e-6)
    assert np.allclose(np.asarray(log0["train/rec_img_loss"]),
                       np.asarray(jnp.mean(jnp.abs(img_recons - img_inputs))),
                       rtol=1e-5, atol=1e-6)

    # Discriminator path, hinge (optimizer_idx=1).
    loss1, log1 = model(inputs, recons, img_inputs, img_recons,
                        optimizer_idx=1, global_step=1)
    loss1 = jax.block_until_ready(loss1)
    ref1 = _ref_forward(model, inputs, recons, img_inputs, img_recons, 1, 1)
    assert np.allclose(np.asarray(loss1), np.asarray(ref1), rtol=1e-4, atol=1e-5)

    # Discriminator path, hinge + R1 (optimizer_idx=1, disc_loss='hinge_r1').
    model_r1 = AutoencoderLPIPSWithDiscriminator(
        k_disc, disc_start=0, disc_loss="hinge_r1", pixel_loss="l1")
    loss2, log2 = model_r1(inputs, recons, img_inputs, img_recons,
                           optimizer_idx=1, global_step=1)
    loss2 = jax.block_until_ready(loss2)
    ref2 = _ref_forward(model_r1, inputs, recons, img_inputs, img_recons, 1, 1)
    assert np.allclose(np.asarray(loss2), np.asarray(ref2), rtol=1e-4, atol=1e-5)

    print("KERNEL_OK")
</pallas_src>

<mosaic_0001>
module attributes {stable_mosaic.version = 11 : i64} {
  func.func @_sq_reduce_kernel(%arg0: i32, %arg1: i32, %arg2: memref<16x512xf32, #tpu.memory_space<vmem>>, %arg3: memref<1x8x512xf32, #tpu.memory_space<vmem>>, %arg4: memref<8x512xf32, #tpu.memory_space<vmem>>) attributes {dimension_semantics = [#tpu.dimension_semantics<parallel>, #tpu.dimension_semantics<arbitrary>], iteration_bounds = array<i64: 1, 1>, scalar_prefetch = 0 : i64, scratch_operands = 1 : i64, tpu.core_type = #tpu.core_type<tc>, window_params = [{transform_indices = @transform_0, window_bounds = array<i64: 16, 512>}, {transform_indices = @transform_1, window_bounds = array<i64: 1, 8, 512>}]} {
    %c0_i32 = arith.constant 0 : i32
    %0 = arith.cmpi eq, %arg1, %c0_i32 : i32
    %1 = arith.extui %0 : i1 to i32
    %c0_i32_0 = arith.constant 0 : i32
    %2 = arith.cmpi ne, %1, %c0_i32_0 : i32
    scf.if %2 {
      %cst_9 = arith.constant 0.000000e+00 : f32
      %25 = vector.broadcast %cst_9 : f32 to vector<8x512xf32>
      %c0_10 = arith.constant 0 : index
      %c0_11 = arith.constant 0 : index
      %26 = vector.load %arg4[%c0_10, %c0_11] : memref<8x512xf32, #tpu.memory_space<vmem>>, vector<8x512xf32>
      tpu.vector_store %arg4[%c0_10, %c0_11], %25 {strides = array<i32>} : memref<8x512xf32, #tpu.memory_space<vmem>>, vector<8x512xf32>,
    } else {
    }
    %c1_i32 = arith.constant 1 : i32
    %3 = arith.muli %arg0, %c1_i32 : i32
    %4 = arith.addi %3, %arg1 : i32
    %c16_i32 = arith.constant 16 : i32
    %5 = arith.muli %4, %c16_i32 : i32
    %6 = tpu.iota {dimensions = array<i32: 0>} : vector<16x1xi32>
    %7 = vector.broadcast %5 : i32 to vector<16x1xi32>
    %8 = arith.addi %7, %6 : vector<16x1xi32>
    %c9_i32 = arith.constant 9 : i32
    %9 = vector.broadcast %c9_i32 : i32 to vector<16x1xi32>
    %10 = arith.cmpi slt, %8, %9 : vector<16x1xi32>
    %c0 = arith.constant 0 : index
    %c0_1 = arith.constant 0 : index
    %11 = vector.load %arg2[%c0, %c0_1] : memref<16x512xf32, #tpu.memory_space<vmem>>, vector<16x512xf32>
    %12 = arith.mulf %11, %11 : vector<16x512xf32>
    %cst = arith.constant 0.000000e+00 : f32
    %13 = vector.shape_cast %10 : vector<16x1xi1> to vector<16x1xi1>
    %14 = vector.broadcast %13 : vector<16x1xi1> to vector<16x512xi1>
    %15 = vector.broadcast %cst : f32 to vector<16x512xf32>
    %16 = arith.select %14, %12, %15 : vector<16x512xi1>, vector<16x512xf32>
    %c0_2 = arith.constant 0 : index
    %c0_3 = arith.constant 0 : index
    %17 = vector.load %arg4[%c0_2, %c0_3] : memref<8x512xf32, #tpu.memory_space<vmem>>, vector<8x512xf32>
    %18 = vector.shape_cast %16 : vector<16x512xf32> to vector<2x8x512xf32>
    %cst_4 = arith.constant dense<0.000000e+00> : vector<8x512xf32>
    %19 = vector.multi_reduction <add>, %18, %cst_4 [0] : vector<2x8x512xf32> to vector<8x512xf32>
    %20 = arith.addf %17, %19 : vector<8x512xf32>
    %c0_5 = arith.constant 0 : index
    %c0_6 = arith.constant 0 : index
    %21 = vector.load %arg4[%c0_5, %c0_6] : memref<8x512xf32, #tpu.memory_space<vmem>>, vector<8x512xf32>
    tpu.vector_store %arg4[%c0_5, %c0_6], %20 {strides = array<i32>} : memref<8x512xf32, #tpu.memory_space<vmem>>, vector<8x512xf32>,
    %c0_i32_7 = arith.constant 0 : i32
    %22 = arith.cmpi eq, %arg1, %c0_i32_7 : i32
    %23 = arith.extui %22 : i1 to i32
    %c0_i32_8 = arith.constant 0 : i32
    %24 = arith.cmpi ne, %23, %c0_i32_8 : i32
    scf.if %24 {
      %c0_9 = arith.constant 0 : index
      %c0_10 = arith.constant 0 : index
      %25 = vector.load %arg4[%c0_9, %c0_10] : memref<8x512xf32, #tpu.memory_space<vmem>>, vector<8x512xf32>
      %c0_11 = arith.constant 0 : index
      %c0_12 = arith.constant 0 : index
      %c0_13 = arith.constant 0 : index
      %26 = vector.load %arg3[%c0_11, %c0_12, %c0_13] : memref<1x8x512xf32, #tpu.memory_space<vmem>>, vector<1x8x512xf32>
      %27 = vector.shape_cast %26 : vector<1x8x512xf32> to vector<8x512xf32>
      %28 = vector.shape_cast %25 : vector<8x512xf32> to vector<1x8x512xf32>
      tpu.vector_store %arg3[%c0_11, %c0_12, %c0_13], %28 {strides = array<i32>} : memref<1x8x512xf32, #tpu.memory_space<vmem>>, vector<1x8x512xf32>,
    } else {
    }
    return
  }
  func.func @transform_0(%arg0: i32, %arg1: i32) -> (i32, i32) {
    %c1_i32 = arith.constant 1 : i32
    %0 = arith.muli %arg0, %c1_i32 : i32
    %1 = arith.addi %0, %arg1 : i32
    %c0_i32 = arith.constant 0 : i32
    %2 = arith.minsi %1, %c0_i32 : i32
    %c0_i32_0 = arith.constant 0 : i32
    %c0_i32_1 = arith.constant 0 : i32
    return %2, %c0_i32_0 : i32, i32
  }
  func.func @transform_1(%arg0: i32, %arg1: i32) -> (i32, i32, i32) {
    %c0_i32 = arith.constant 0 : i32
    %c0_i32_0 = arith.constant 0 : i32
    %c0_i32_1 = arith.constant 0 : i32
    return %arg0, %c0_i32, %c0_i32_0 : i32, i32, i32
  }
}

</mosaic_0001>

<llo_original>
// kernel: tpu_custom_call.1
$region0: #{tpu_custom_call.1}
  #allocation0 [shape = 'u32[]', space=smem, size = 0x4, offset = 0x4, fixed_abs, tag = 'smem constant byte address 0x4 - core index']
  #allocation1 [shape = 'u32[144,128]{1,0:T(1,128)}', space=vmem, size = 0x12000, scoped, tag = 'internal scratch']
  #allocation2 [shape = 'f32[8,512]{1,0:T(8,128)}', space=vmem, size = 0x4000, scoped, tag = 'scratch operand']
  %s0 = inlined_call_operand.hbm [shape: f32[9,512], index: 0, kind: input, shape index: {}]
  %s1 = inlined_call_operand.hbm [shape: f32[1,8,512], index: 1, kind: output, shape index: {}]
  %s2 = sld [smem:[#allocation0]]
  $region26: #{tpu_custom_call.1} parent=0
    _
  %s4 = ssub.s32 1, %s2
  %s5 = scalar_select 0, %s4, %s2
  $region1: #{tpu_custom_call.1} parent=0
    #allocation3 [shape = 'u8[32768]{0}', space=vmem, size = 0x8000, scoped, tag = 'input window, operand 0, single buffered']
    #allocation4 [shape = 's32[1]{0}', space=sflag, size = 0x4, scoped, tag = 'scoped memory for tpu_custom_call.1']
    #allocation5 [shape = 's32[1]{0}', space=sflag, size = 0x4, scoped, tag = 'scoped memory for tpu_custom_call.1']
    #allocation6 [shape = 'u8[16384]{0}', space=vmem, size = 0x4000, scoped, tag = 'output window, operand 0, single buffered']
    %6 = vsyncpa [#allocation4], 0
    %7 = vsyncpa [#allocation5], 0
    // Predicated region
    $region2: #{tpu_custom_call.1} parent=1 // pred_check
      _
    $region3: #{tpu_custom_call.1} parent=1 // pred_check_branch
      %9 = sbr.rel (0) target = $region5
    $region4: #{tpu_custom_call.1} parent=1 // pred_region
      %s10 = sadd.s32 0, 0
      %p11 = scmp.lt.s32.totalorder %s10, 0
      %s12 = scalar_select %p11, %s10, 0
      %s13 = smul.u32 2, %s12
      %s15 = ssub.s32 1024, 1024
      %16 = vsyncadd [#allocation4], %s15
      %s17 = smul.addr %s13, 4
      %s18 = smul.addr %s17, 128
      %s19 = scalar_lea.hbm %s0, %s18
      %s20 = sshll.u32 [#allocation3], 4
      %s21 = int_to_ptr.vmem [resolvable:$true] %s20
      %26 = dma.hbm_to_vmem [thread:$0]  %s19, 1024, %s21, [#allocation4], 512, 512, 32
    $region5: #{tpu_custom_call.1} parent=1 // pred_fallthru
      _
    // Predicated region
    $region6: #{tpu_custom_call.1} parent=1 // pred_check
      _
    $region7: #{tpu_custom_call.1} parent=1 // pred_check_branch
      %28 = sbr.rel (0) target = $region9
    $region8: #{tpu_custom_call.1} parent=1 // pred_region
      %29 = dma.done [#allocation4], 1024
    $region9: #{tpu_custom_call.1} parent=1 // pred_fallthru
      _
    %s30 = sadd.s32 0, 0
    %p31 = scmp.lt.s32.totalorder %s30, 0
    %s32 = scalar_select %p31, %s30, 0
    %s33 = smul.u32 2, %s32
    %p34 = scmp.eq.s32.totalorder 0, 0
    // Predicated region
    $region10: #{tpu_custom_call.1} parent=1 // pred_check
      %p35 = pneg %p34
    $region11: #{tpu_custom_call.1} parent=1 // pred_check_branch
      %37 = sbr.rel (%p35) target = $region13
    $region12: #{tpu_custom_call.1} parent=1 // pred_region
      %38 = vst [vmem:[#allocation2] sm:$0xff] 0.0
      %39 = vst [vmem:[#allocation2 + $0x8] sm:$0xff] 0.0
      %40 = vst [vmem:[#allocation2 + $0x10] sm:$0xff] 0.0
      %41 = vst [vmem:[#allocation2 + $0x18] sm:$0xff] 0.0
    $region13: #{tpu_custom_call.1} parent=1 // pred_fallthru
      _
    %s42 = sadd.s32 0, 0
    %s43 = smul.u32 %s42, 16
    %v44 = vlaneseq
    %v45 = vshrl.u32 %v44, 7
    %v46 = vadd.s32 %v45, 8
    %v47 = vstv %s43
    %v48 = vadd.s32 %v47, %v45
    %v49 = vadd.s32 %v47, %v46
    %vm50 = vcmp.lt.s32.totalorder %v48, 9
    %vm51 = vcmp.lt.s32.totalorder %v49, 9
    %v52 = vld [vmem:[#allocation3] sm:$0xff]
    %v53 = vld [vmem:[#allocation3 + $0x8] sm:$0xff]
    %v54 = vld [vmem:[#allocation3 + $0x10] sm:$0xff]
    %v55 = vld [vmem:[#allocation3 + $0x18] sm:$0xff]
    %v56 = vld [vmem:[#allocation3 + $0x20] sm:$0xff]
    %v57 = vld [vmem:[#allocation3 + $0x28] sm:$0xff]
    %v58 = vld [vmem:[#allocation3 + $0x30] sm:$0xff]
    %v59 = vld [vmem:[#allocation3 + $0x38] sm:$0xff]
    %v60 = vmul.f32 %v52, %v52
    %v61 = vmul.f32 %v53, %v53
    %v62 = vmul.f32 %v54, %v54
    %v63 = vmul.f32 %v55, %v55
    %v64 = vmul.f32 %v56, %v56
    %v65 = vmul.f32 %v57, %v57
    %v66 = vmul.f32 %v58, %v58
    %v67 = vmul.f32 %v59, %v59
    %v68 = vsel %vm50, 1, 0
    %v69 = vsel %vm51, 1, 0
    %vm70 = vcmp.eq.s32.totalorder %v68, 1
    %vm71 = vcmp.eq.s32.totalorder %v69, 1
    %v72 = vsel %vm70, %v60, 0.0
    %v73 = vsel %vm70, %v61, 0.0
    %v74 = vsel %vm70, %v62, 0.0
    %v75 = vsel %vm70, %v63, 0.0
    %v76 = vsel %vm71, %v64, 0.0
    %v77 = vsel %vm71, %v65, 0.0
    %v78 = vsel %vm71, %v66, 0.0
    %v79 = vsel %vm71, %v67, 0.0
    %v80 = vld [vmem:[#allocation2] sm:$0xff]
    %v81 = vld [vmem:[#allocation2 + $0x8] sm:$0xff]
    %v82 = vld [vmem:[#allocation2 + $0x10] sm:$0xff]
    %v83 = vld [vmem:[#allocation2 + $0x18] sm:$0xff]
    %v84 = vadd.f32 %v72, %v76
    %v85 = vadd.f32 %v73, %v77
    %v86 = vadd.f32 %v74, %v78
    %v87 = vadd.f32 %v75, %v79
    %v88 = vadd.f32 %v80, %v84
    %v89 = vadd.f32 %v81, %v85
    %v90 = vadd.f32 %v82, %v86
    %v91 = vadd.f32 %v83, %v87
    %92 = vst [vmem:[#allocation2] sm:$0xff] %v88
    %93 = vst [vmem:[#allocation2 + $0x8] sm:$0xff] %v89
    %94 = vst [vmem:[#allocation2 + $0x10] sm:$0xff] %v90
    %95 = vst [vmem:[#allocation2 + $0x18] sm:$0xff] %v91
    // Predicated region
    $region14: #{tpu_custom_call.1} parent=1 // pred_check
      %p96 = pneg %p34
    $region15: #{tpu_custom_call.1} parent=1 // pred_check_branch
      %98 = sbr.rel (%p96) target = $region17
    $region16: #{tpu_custom_call.1} parent=1 // pred_region
      %v99 = vld [vmem:[#allocation2] sm:$0xff]
      %v100 = vld [vmem:[#allocation2 + $0x8] sm:$0xff]
      %v101 = vld [vmem:[#allocation2 + $0x10] sm:$0xff]
      %v102 = vld [vmem:[#allocation2 + $0x18] sm:$0xff]
      %103 = vst [vmem:[#allocation6] sm:$0xff] %v99
      %104 = vst [vmem:[#allocation6 + $0x8] sm:$0xff] %v100
      %105 = vst [vmem:[#allocation6 + $0x10] sm:$0xff] %v101
      %106 = vst [vmem:[#allocation6 + $0x18] sm:$0xff] %v102
    $region17: #{tpu_custom_call.1} parent=1 // pred_fallthru
      _
    // Predicated region
    $region18: #{tpu_custom_call.1} parent=1 // pred_check
      _
    $region19: #{tpu_custom_call.1} parent=1 // pred_check_branch
      %108 = sbr.rel (0) target = $region21
    $region20: #{tpu_custom_call.1} parent=1 // pred_region
      %s110 = ssub.s32 512, 512
      %111 = vsyncadd [#allocation5], %s110
      %s113 = sshll.u32 [#allocation6], 4
      %s114 = int_to_ptr.vmem [resolvable:$true] %s113
      %116 = dma.vmem_to_hbm [thread:$0]  %s114, 512, %s1, [#allocation5]
    $region21: #{tpu_custom_call.1} parent=1 // pred_fallthru
      _
    // Predicated region
    $region22: #{tpu_custom_call.1} parent=1 // pred_check
      _
    $region23: #{tpu_custom_call.1} parent=1 // pred_check_branch
      %118 = sbr.rel (0) target = $region25
    $region24: #{tpu_custom_call.1} parent=1 // pred_region
      %119 = dma.done [#allocation5], 512
    $region25: #{tpu_custom_call.1} parent=1 // pred_fallthru
      _
    %120 = vsyncpa [#allocation4], 1
    %121 = vsyncpa [#allocation5], 1

</llo_original>
